<compile_context>
chip_gen: v7x
topology: tpu7x:2x2x1
jax: 0.10.0
libtpu: 0.0.40
codegen_flags: <defaults>
</compile_context>

<pallas_src>
import math
import functools

import jax
import jax.numpy as jnp
from jax import lax
from jax.experimental import pallas as pl
from jax.experimental.pallas import tpu as pltpu


# ----------------------------------------------------------------------------
# Buffer construction (mirrors PositionalEncoding.__init__)
# ----------------------------------------------------------------------------
def make_pos_embedding(emb_size: int, maxlen: int = 5000) -> jnp.ndarray:
    """Returns the (maxlen, 1, emb_size) sinusoidal table, fp32, deterministic."""
    den = jnp.exp(
        -jnp.arange(0, emb_size, 2, dtype=jnp.float32) * (math.log(10000.0) / emb_size)
    )
    pos = jnp.arange(0, maxlen, dtype=jnp.float32).reshape(maxlen, 1)
    pe = jnp.zeros((maxlen, emb_size), dtype=jnp.float32)
    pe = pe.at[:, 0::2].set(jnp.sin(pos * den))
    pe = pe.at[:, 1::2].set(jnp.cos(pos * den))
    return pe[:, None, :]  # (maxlen, 1, emb_size)


# ----------------------------------------------------------------------------
# Kernels
# ----------------------------------------------------------------------------
_SEED_MIX = 1540483477  # odd 32-bit constant: decorrelates per-tile PRNG streams


def _keep_mask_from_bits(bits, p: float):
    """keep-with-prob-(1-p) mask from uniform 32-bit integers (int32 or uint32)."""
    thr31 = min(int(p * (1 << 31)), (1 << 31) - 1)
    mask31 = jnp.asarray(0x7FFFFFFF, dtype=bits.dtype)
    return (bits & mask31) >= jnp.asarray(thr31, dtype=bits.dtype)


def _pe_add_kernel(x_ref, pos_ref, o_ref):
    # x_ref: (ts, B, E); pos_ref: (ts, 1, E) -> implicit broadcast over batch.
    o_ref[...] = (x_ref[...] + pos_ref[...]).astype(o_ref.dtype)


def _pe_add_dropout_hw_kernel(seed_ref, x_ref, pos_ref, o_ref, *, p: float):
    """Training path: add + inverted dropout using the hardware PRNG."""
    y = x_ref[...] + pos_ref[...]                          # (ts, B, E)
    # Distinct stream per (seed, grid step); int32 multiply wraps, which is fine.
    pltpu.prng_seed(seed_ref[0] + pl.program_id(0) * jnp.int32(_SEED_MIX))
    bits = pltpu.prng_random_bits(y.shape)
    keep = _keep_mask_from_bits(bits, p)
    scale = 1.0 / (1.0 - p)
    o_ref[...] = jnp.where(keep, y * scale, jnp.zeros_like(y)).astype(o_ref.dtype)


def _pe_add_dropout_hash_kernel(seed_ref, x_ref, pos_ref, o_ref, *, p: float):
    """Fallback training path: counter-based fmix32 hash RNG (no HW PRNG needed)."""
    y = x_ref[...] + pos_ref[...]                          # (ts, B, E)
    ts, B, E = y.shape
    row0 = pl.program_id(0) * ts
    r = lax.broadcasted_iota(jnp.int32, y.shape, 0)
    b = lax.broadcasted_iota(jnp.int32, y.shape, 1)
    c = lax.broadcasted_iota(jnp.int32, y.shape, 2)
    # Unique per element for realistic shapes (< 2^32 elements).
    idx = (((row0 + r) * B + b) * E + c).astype(jnp.uint32)
    seed = seed_ref[0].astype(jnp.uint32)
    h = idx * jnp.uint32(0x9E3779B1) + seed * jnp.uint32(0x85EBCA77)
    h = h ^ (h >> 16)
    h = h * jnp.uint32(0x7FEB352D)
    h = h ^ (h >> 15)
    h = h * jnp.uint32(0x846CA68B)
    h = h ^ (h >> 16)
    keep = _keep_mask_from_bits(h, p)
    scale = 1.0 / (1.0 - p)
    o_ref[...] = jnp.where(keep, y * scale, jnp.zeros_like(y)).astype(o_ref.dtype)


# ----------------------------------------------------------------------------
# Tiling helper
# ----------------------------------------------------------------------------
def _round_up(x: int, m: int) -> int:
    return -(-x // m) * m


def _choose_seq_tile(S: int, B: int, E: int, itemsize: int,
                     target_block_bytes: int = 4 << 20) -> int:
    """Largest seq tile whose VMEM block stays ~target_block_bytes.

    Accounts for the (sublane, 128) tile padding of each (B, E) slice, rounds
    ts to a dtype-aware granularity (ts is a leading dim so this is only for
    tidy splits), and -- when possible -- caps ts so the ("parallel",) grid has
    at least 2 steps (v7x has two TensorCores per chip).
    """
    sub = max(8, 32 // itemsize)            # 8 f32 / 16 bf16 / 32 int8-fp8
    padded_row = _round_up(B, sub) * _round_up(E, 128) * itemsize
    ts = max(target_block_bytes // max(padded_row, 1), 1)
    ts = max((ts // sub) * sub, sub)
    ts = min(ts, S)
    if ts >= S and S > sub:                 # give both v7x cores grid work
        ts = min(S, _round_up(pl.cdiv(S, 2), sub))
    return ts


# ----------------------------------------------------------------------------
# Wrapper (forward pass)
# ----------------------------------------------------------------------------
def positional_encoding_forward(
    token_embedding: jnp.ndarray,      # (S, B, E)
    pos_embedding: jnp.ndarray,        # (maxlen, 1, E)
    *,
    dropout_p: float = 0.0,
    training: bool = False,
    seed: int = 0,
    use_hw_prng: bool = True,
) -> jnp.ndarray:
    S, B, E = token_embedding.shape
    dtype = token_embedding.dtype

    if training and dropout_p >= 1.0:       # PyTorch: p = 1 drops everything
        return jnp.zeros_like(token_embedding)

    # Slice + cast the positional table outside the kernel: halves the pos DMA
    # for bf16 inputs and keeps the in-kernel add in the input dtype.
    pos = pos_embedding[:S].astype(dtype)                  # (S, 1, E)

    itemsize = jnp.dtype(dtype).itemsize
    ts = _choose_seq_tile(S, B, E, itemsize)
    grid = (pl.cdiv(S, ts),)
    out_shape = jax.ShapeDtypeStruct((S, B, E), dtype)

    cparams = pltpu.CompilerParams(
        dimension_semantics=("parallel",),
        vmem_limit_bytes=32 << 20,          # 4 MiB blocks x 4 live buffers + pos
    )
    # Pure streaming op: ~1 flop/elem; read x + pos, write out.
    cost = pl.CostEstimate(
        flops=S * B * E,
        transcendentals=0,
        bytes_accessed=(2 * S * B * E + S * E) * itemsize,
    )

    if training and dropout_p > 0.0:
        seed_arr = jnp.asarray([seed], dtype=jnp.int32)

        def call(kernel_fn):
            return pl.pallas_call(
                functools.partial(kernel_fn, p=float(dropout_p)),
                out_shape=out_shape,
                grid_spec=pltpu.PrefetchScalarGridSpec(
                    num_scalar_prefetch=1,
                    grid=grid,
                    in_specs=[
                        pl.BlockSpec((ts, B, E), lambda i, sref: (i, 0, 0)),
                        pl.BlockSpec((ts, 1, E), lambda i, sref: (i, 0, 0)),
                    ],
                    out_specs=pl.BlockSpec((ts, B, E), lambda i, sref: (i, 0, 0)),
                ),
                compiler_params=cparams,
                cost_estimate=cost,
            )(seed_arr, token_embedding, pos)

        if use_hw_prng:
            try:
                return call(_pe_add_dropout_hw_kernel)
            except Exception:
                # Harness without a PRNG lowering (e.g. interpret-style): fall
                # back to the counter-hash RNG; semantics are identical.
                pass
        return call(_pe_add_dropout_hash_kernel)

    # Eval mode: dropout is identity -> broadcasted add only.
    return pl.pallas_call(
        _pe_add_kernel,
        out_shape=out_shape,
        grid=grid,
        in_specs=[
            pl.BlockSpec((ts, B, E), lambda i: (i, 0, 0)),
            pl.BlockSpec((ts, 1, E), lambda i: (i, 0, 0)),
        ],
        out_specs=pl.BlockSpec((ts, B, E), lambda i: (i, 0, 0)),
        compiler_params=cparams,
        cost_estimate=cost,
    )(token_embedding, pos)

# TODO(synk): this op is pure elementwise / HBM-bound; in a full model it should
# be fused into the adjacent embedding-lookup or attention kernel to avoid a
# full extra activation read+write through HBM.


# ----------------------------------------------------------------------------
# Demo / correctness check
# ----------------------------------------------------------------------------
if __name__ == "__main__":
    key = jax.random.PRNGKey(0)
    S, B, E = 8, 2, 32          # seq_len, batch, emb_size
    MAXLEN = 64
    DROPOUT_P = 0.1

    x = jax.random.normal(key, (S, B, E), dtype=jnp.float32)
    pos_embedding = make_pos_embedding(E, maxlen=MAXLEN)   # (MAXLEN, 1, E)

    # Eval-mode forward (dropout == identity), checked against a plain-JAX ref.
    out = positional_encoding_forward(
        x, pos_embedding, dropout_p=DROPOUT_P, training=False
    )
    out = jax.block_until_ready(out)
    ref = x + pos_embedding[:S]                             # broadcast over batch
    assert out.shape == (S, B, E) and out.dtype == x.dtype
    assert jnp.allclose(out, ref, atol=1e-6, rtol=1e-6), "eval-mode mismatch"

    # Training-mode forward (exercises the in-kernel dropout path).
    out_tr = positional_encoding_forward(
        x, pos_embedding, dropout_p=DROPOUT_P, training=True, seed=123
    )
    out_tr = jax.block_until_ready(out_tr)
    # Dropout outputs are either 0 or (x+pos)/(1-p).
    scaled_ref = ref / (1.0 - DROPOUT_P)
    close_to_scaled = jnp.isclose(out_tr, scaled_ref, atol=1e-5, rtol=1e-5)
    close_to_zero = jnp.isclose(out_tr, 0.0, atol=1e-6)
    assert bool(jnp.all(close_to_scaled | close_to_zero)), "dropout-mode mismatch"
    drop_frac = float(jnp.mean(close_to_zero))
    assert 0.0 < drop_frac < 0.6, f"implausible drop fraction {drop_frac}"

    print("KERNEL_OK")
</pallas_src>

<mosaic_0001>
module attributes {stable_mosaic.version = 11 : i64} {
  func.func @_pe_add_kernel(%arg0: i32, %arg1: memref<8x2x32xf32, #tpu.memory_space<vmem>>, %arg2: memref<8x1x32xf32, #tpu.memory_space<vmem>>, %arg3: memref<8x2x32xf32, #tpu.memory_space<vmem>>) attributes {dimension_semantics = [#tpu.dimension_semantics<parallel>], iteration_bounds = array<i64: 1>, scalar_prefetch = 0 : i64, scratch_operands = 0 : i64, tpu.core_type = #tpu.core_type<tc>, window_params = [{transform_indices = @transform_0, window_bounds = array<i64: 8, 2, 32>}, {transform_indices = @transform_1, window_bounds = array<i64: 8, 1, 32>}, {transform_indices = @transform_2, window_bounds = array<i64: 8, 2, 32>}]} {
    %c0 = arith.constant 0 : index
    %c0_0 = arith.constant 0 : index
    %c0_1 = arith.constant 0 : index
    %0 = vector.load %arg1[%c0, %c0_0, %c0_1] : memref<8x2x32xf32, #tpu.memory_space<vmem>>, vector<8x2x32xf32>
    %c0_2 = arith.constant 0 : index
    %c0_3 = arith.constant 0 : index
    %c0_4 = arith.constant 0 : index
    %1 = vector.load %arg2[%c0_2, %c0_3, %c0_4] : memref<8x1x32xf32, #tpu.memory_space<vmem>>, vector<8x1x32xf32>
    %2 = vector.broadcast %1 : vector<8x1x32xf32> to vector<8x2x32xf32>
    %3 = arith.addf %0, %2 : vector<8x2x32xf32>
    %c0_5 = arith.constant 0 : index
    %c0_6 = arith.constant 0 : index
    %c0_7 = arith.constant 0 : index
    %4 = vector.load %arg3[%c0_5, %c0_6, %c0_7] : memref<8x2x32xf32, #tpu.memory_space<vmem>>, vector<8x2x32xf32>
    tpu.vector_store %arg3[%c0_5, %c0_6, %c0_7], %3 {strides = array<i32>} : memref<8x2x32xf32, #tpu.memory_space<vmem>>, vector<8x2x32xf32>,
    return
  }
  func.func @transform_0(%arg0: i32) -> (i32, i32, i32) {
    %c0_i32 = arith.constant 0 : i32
    %c0_i32_0 = arith.constant 0 : i32
    %c0_i32_1 = arith.constant 0 : i32
    return %arg0, %c0_i32, %c0_i32_0 : i32, i32, i32
  }
  func.func @transform_1(%arg0: i32) -> (i32, i32, i32) {
    %c0_i32 = arith.constant 0 : i32
    %c0_i32_0 = arith.constant 0 : i32
    %c0_i32_1 = arith.constant 0 : i32
    return %arg0, %c0_i32, %c0_i32_0 : i32, i32, i32
  }
  func.func @transform_2(%arg0: i32) -> (i32, i32, i32) {
    %c0_i32 = arith.constant 0 : i32
    %c0_i32_0 = arith.constant 0 : i32
    %c0_i32_1 = arith.constant 0 : i32
    return %arg0, %c0_i32, %c0_i32_0 : i32, i32, i32
  }
}

</mosaic_0001>

<llo_original>
// kernel: tpu_custom_call.1
$region0: #{tpu_custom_call.1}
  #allocation0 [shape = 'u32[]', space=smem, size = 0x4, offset = 0x4, fixed_abs, tag = 'smem constant byte address 0x4 - core index']
  #allocation1 [shape = 'u32[144,128]{1,0:T(1,128)}', space=vmem, size = 0x12000, scoped, tag = 'internal scratch']
  %s0 = inlined_call_operand.hbm [shape: f32[8,2,32], index: 0, kind: input, shape index: {}]
  %s1 = inlined_call_operand.hbm [shape: f32[8,1,32], index: 1, kind: input, shape index: {}]
  %s2 = inlined_call_operand.hbm [shape: f32[8,2,32], index: 2, kind: output, shape index: {}]
  %s3 = sld [smem:[#allocation0]]
  $region26: #{tpu_custom_call.1} parent=0
    _
  %s5 = ssub.s32 1, %s3
  %s6 = scalar_select 0, %s5, %s3
  $region1: #{tpu_custom_call.1} parent=0
    #allocation2 [shape = 'u8[8192]{0}', space=vmem, size = 0x2000, scoped, tag = 'input window, operand 0, single buffered']
    #allocation3 [shape = 's32[1]{0}', space=sflag, size = 0x4, scoped, tag = 'scoped memory for tpu_custom_call.1']
    #allocation4 [shape = 's32[1]{0}', space=sflag, size = 0x4, scoped, tag = 'scoped memory for tpu_custom_call.1']
    #allocation5 [shape = 'u8[4096]{0}', space=vmem, size = 0x1000, scoped, tag = 'input window, operand 1, single buffered']
    #allocation6 [shape = 's32[1]{0}', space=sflag, size = 0x4, scoped, tag = 'scoped memory for tpu_custom_call.1']
    #allocation7 [shape = 'u8[8192]{0}', space=vmem, size = 0x2000, scoped, tag = 'output window, operand 0, single buffered']
    %7 = vsyncpa [#allocation3], 0
    %8 = vsyncpa [#allocation6], 0
    %9 = vsyncpa [#allocation4], 0
    // Predicated region
    $region2: #{tpu_custom_call.1} parent=1 // pred_check
      _
    $region3: #{tpu_custom_call.1} parent=1 // pred_check_branch
      %11 = sbr.rel (0) target = $region5
    $region4: #{tpu_custom_call.1} parent=1 // pred_region
      %s13 = ssub.s32 256, 256
      %14 = vsyncadd [#allocation3], %s13
      %s15 = sshll.u32 [#allocation2], 4
      %s16 = int_to_ptr.vmem [resolvable:$true] %s15
      %21 = dma.hbm_to_vmem [thread:$0]  %s0, 256, %s16, [#allocation3], 32, 32, 2
    $region5: #{tpu_custom_call.1} parent=1 // pred_fallthru
      _
    // Predicated region
    $region6: #{tpu_custom_call.1} parent=1 // pred_check
      _
    $region7: #{tpu_custom_call.1} parent=1 // pred_check_branch
      %23 = sbr.rel (0) target = $region9
    $region8: #{tpu_custom_call.1} parent=1 // pred_region
      %s25 = ssub.s32 128, 128
      %26 = vsyncadd [#allocation6], %s25
      %s27 = sshll.u32 [#allocation5], 4
      %s28 = int_to_ptr.vmem [resolvable:$true] %s27
      %33 = dma.hbm_to_vmem [thread:$0]  %s1, 128, %s28, [#allocation6], 16, 16, 1
    $region9: #{tpu_custom_call.1} parent=1 // pred_fallthru
      _
    // Predicated region
    $region10: #{tpu_custom_call.1} parent=1 // pred_check
      _
    $region11: #{tpu_custom_call.1} parent=1 // pred_check_branch
      %35 = sbr.rel (0) target = $region13
    $region12: #{tpu_custom_call.1} parent=1 // pred_region
      %36 = dma.done [#allocation3], 256
    $region13: #{tpu_custom_call.1} parent=1 // pred_fallthru
      _
    // Predicated region
    $region14: #{tpu_custom_call.1} parent=1 // pred_check
      _
    $region15: #{tpu_custom_call.1} parent=1 // pred_check_branch
      %38 = sbr.rel (0) target = $region17
    $region16: #{tpu_custom_call.1} parent=1 // pred_region
      %39 = dma.done [#allocation6], 128
    $region17: #{tpu_custom_call.1} parent=1 // pred_fallthru
      _
    %v40 = vld [vmem:[#allocation2] sm:$0x3]
    %v41 = vld [vmem:[#allocation2 + $0x2] sm:$0x3]
    %v42 = vld [vmem:[#allocation2 + $0x4] sm:$0x3]
    %v43 = vld [vmem:[#allocation2 + $0x6] sm:$0x3]
    %v44 = vld [vmem:[#allocation2 + $0x8] sm:$0x3]
    %v45 = vld [vmem:[#allocation2 + $0xa] sm:$0x3]
    %v46 = vld [vmem:[#allocation2 + $0xc] sm:$0x3]
    %v47 = vld [vmem:[#allocation2 + $0xe] sm:$0x3]
    %v48 = vld [vmem:[#allocation5] sm:$0x1]
    %v49 = vld [vmem:[#allocation5 + $0x1] sm:$0x1]
    %v50 = vld [vmem:[#allocation5 + $0x2] sm:$0x1]
    %v51 = vld [vmem:[#allocation5 + $0x3] sm:$0x1]
    %v52 = vld [vmem:[#allocation5 + $0x4] sm:$0x1]
    %v53 = vld [vmem:[#allocation5 + $0x5] sm:$0x1]
    %v54 = vld [vmem:[#allocation5 + $0x6] sm:$0x1]
    %v55 = vld [vmem:[#allocation5 + $0x7] sm:$0x1]
    %v64 = vlaneseq
    %v65 = vshrl.u32 %v64, 7
    %v66 = vsub.s32 0, %v65
    %v67 = vrot.slane %v48, %v66
    %v68 = vlaneseq
    %v69 = vshrl.u32 %v68, 7
    %v70 = vsub.s32 0, %v69
    %v71 = vrot.slane %v49, %v70
    %v72 = vlaneseq
    %v73 = vshrl.u32 %v72, 7
    %v74 = vsub.s32 0, %v73
    %v75 = vrot.slane %v50, %v74
    %v76 = vlaneseq
    %v77 = vshrl.u32 %v76, 7
    %v78 = vsub.s32 0, %v77
    %v79 = vrot.slane %v51, %v78
    %v80 = vlaneseq
    %v81 = vshrl.u32 %v80, 7
    %v82 = vsub.s32 0, %v81
    %v83 = vrot.slane %v52, %v82
    %v84 = vlaneseq
    %v85 = vshrl.u32 %v84, 7
    %v86 = vsub.s32 0, %v85
    %v87 = vrot.slane %v53, %v86
    %v88 = vlaneseq
    %v89 = vshrl.u32 %v88, 7
    %v90 = vsub.s32 0, %v89
    %v91 = vrot.slane %v54, %v90
    %v92 = vlaneseq
    %v93 = vshrl.u32 %v92, 7
    %v94 = vsub.s32 0, %v93
    %v95 = vrot.slane %v55, %v94
    %v104 = vadd.f32 %v40, %v67
    %v105 = vadd.f32 %v41, %v71
    %v106 = vadd.f32 %v42, %v75
    %v107 = vadd.f32 %v43, %v79
    %v108 = vadd.f32 %v44, %v83
    %v109 = vadd.f32 %v45, %v87
    %v110 = vadd.f32 %v46, %v91
    %v111 = vadd.f32 %v47, %v95
    %vm112 = vcmask 254976
    %113 = vst.msk [vmem:[#allocation7] sm:$0x3] %vm112, %v104
    %114 = vst.msk [vmem:[#allocation7 + $0x2] sm:$0x3] %vm112, %v105
    %115 = vst.msk [vmem:[#allocation7 + $0x4] sm:$0x3] %vm112, %v106
    %116 = vst.msk [vmem:[#allocation7 + $0x6] sm:$0x3] %vm112, %v107
    %117 = vst.msk [vmem:[#allocation7 + $0x8] sm:$0x3] %vm112, %v108
    %118 = vst.msk [vmem:[#allocation7 + $0xa] sm:$0x3] %vm112, %v109
    %119 = vst.msk [vmem:[#allocation7 + $0xc] sm:$0x3] %vm112, %v110
    %120 = vst.msk [vmem:[#allocation7 + $0xe] sm:$0x3] %vm112, %v111
    // Predicated region
    $region18: #{tpu_custom_call.1} parent=1 // pred_check
      _
    $region19: #{tpu_custom_call.1} parent=1 // pred_check_branch
      %122 = sbr.rel (0) target = $region21
    $region20: #{tpu_custom_call.1} parent=1 // pred_region
      %s124 = ssub.s32 256, 256
      %125 = vsyncadd [#allocation4], %s124
      %s126 = sshll.u32 [#allocation7], 4
      %s127 = int_to_ptr.vmem [resolvable:$true] %s126
      %132 = dma.vmem_to_hbm [thread:$0]  %s127, 256, %s2, [#allocation4], 32, 32, 2
    $region21: #{tpu_custom_call.1} parent=1 // pred_fallthru
      _
    // Predicated region
    $region22: #{tpu_custom_call.1} parent=1 // pred_check
      _
    $region23: #{tpu_custom_call.1} parent=1 // pred_check_branch
      %134 = sbr.rel (0) target = $region25
    $region24: #{tpu_custom_call.1} parent=1 // pred_region
      %135 = dma.done [#allocation4], 256
    $region25: #{tpu_custom_call.1} parent=1 // pred_fallthru
      _
    %136 = vsyncpa [#allocation3], 1
    %137 = vsyncpa [#allocation6], 1
    %138 = vsyncpa [#allocation4], 1

</llo_original>
